<compile_context>
chip_gen: v7x
topology: tpu7x:2x2x1
jax: 0.10.0
libtpu: 0.0.40
codegen_flags: <defaults>
</compile_context>

<pallas_src>
import functools

import jax
import jax.numpy as jnp
from jax.experimental import pallas as pl
from jax.experimental.pallas import tpu as pltpu

LANES = 128


def _ceil_to(n, m):
    return (n + m - 1) // m * m


def _slab_layout(state_dim, action_dim, hidden):
    """Row offsets (all 8-aligned) of each section inside the packed param slab."""
    del hidden  # layer-2/3 sections are stored at full 128-row padded width
    o_w1s = 0
    o_w1a = o_w1s + _ceil_to(state_dim, 8)
    o_b1 = o_w1a + _ceil_to(action_dim, 8)
    o_w2 = o_b1 + 8
    o_b2 = o_w2 + LANES
    o_w3 = o_b2 + 8
    o_b3 = o_w3 + LANES
    rows = o_b3 + 8
    return (o_w1s, o_w1a, o_b1, o_w2, o_b2, o_w3, o_b3), rows


def _pack_params(params1, params2, state_dim, action_dim):
    """Pack both Q-nets into one zero-padded (rows, 128) f32 slab.

    params{1,2} = (W1 (in,H), b1 (H,), W2 (H,H), b2 (H,), W3 (H,1), b3 (1,)),
    with W stored as (in_features, out_features) so y = x @ W + b.
    """
    w11, b11, w12, b12, w13, b13 = params1
    w21, b21, w22, b22, w23, b23 = params2
    S, A = state_dim, action_dim
    H = w11.shape[1]
    H2 = 2 * H
    (o_w1s, o_w1a, o_b1, o_w2, o_b2, o_w3, o_b3), rows = _slab_layout(S, A, H)

    slab = jnp.zeros((rows, LANES), jnp.float32)
    # Layer 1: fused along the output axis (net1 -> cols [0,H), net2 -> [H,2H)),
    # split along the input axis into a states part and an actions part.
    slab = slab.at[o_w1s:o_w1s + S, 0:H].set(w11[:S])
    slab = slab.at[o_w1s:o_w1s + S, H:H2].set(w21[:S])
    slab = slab.at[o_w1a:o_w1a + A, 0:H].set(w11[S:])
    slab = slab.at[o_w1a:o_w1a + A, H:H2].set(w21[S:])
    slab = slab.at[o_b1, 0:H].set(b11)
    slab = slab.at[o_b1, H:H2].set(b21)
    # Layer 2: block-diagonal in the fused 2H space (padded lanes stay zero).
    slab = slab.at[o_w2:o_w2 + H, 0:H].set(w12)
    slab = slab.at[o_w2 + H:o_w2 + H2, H:H2].set(w22)
    slab = slab.at[o_b2, 0:H].set(b12)
    slab = slab.at[o_b2, H:H2].set(b22)
    # Layer 3: q1 written to lane 1, q2 to lane 2 (lane 0 is reserved for qmin).
    slab = slab.at[o_w3:o_w3 + H, 1].set(w13[:, 0])
    slab = slab.at[o_w3 + H:o_w3 + H2, 2].set(w23[:, 0])
    slab = slab.at[o_b3, 1].set(b13[0])
    slab = slab.at[o_b3, 2].set(b23[0])
    return slab


def _twin_q_kernel(s_ref, a_ref, p_ref, out_ref, *, state_dim, action_dim, offs):
    """Fused twin-Q MLP: 3 lane-dense matmuls + relu + bias + lane-wise min."""
    o_w1s, o_w1a, o_b1, o_w2, o_b2, o_w3, o_b3 = offs
    S, A = state_dim, action_dim

    s = s_ref[...]                                   # (bb, S)
    a = a_ref[...]                                   # (bb, A)

    w1s = p_ref[o_w1s:o_w1s + S, :]                  # (S, 128)
    w1a = p_ref[o_w1a:o_w1a + A, :]                  # (A, 128)
    b1 = p_ref[o_b1:o_b1 + 1, :]                     # (1, 128)
    w2 = p_ref[o_w2:o_w2 + LANES, :]                 # (128, 128)
    b2 = p_ref[o_b2:o_b2 + 1, :]
    w3 = p_ref[o_w3:o_w3 + LANES, :]                 # (128, 128)
    b3 = p_ref[o_b3:o_b3 + 1, :]

    # Layer 1: both nets at once; concat replaced by a split matmul.
    h = (jnp.dot(s, w1s, preferred_element_type=jnp.float32)
         + jnp.dot(a, w1a, preferred_element_type=jnp.float32) + b1)
    h = jnp.maximum(h, 0.0)
    # Layer 2: block-diagonal fused weight; padded lanes stay exactly zero.
    h = jnp.maximum(jnp.dot(h, w2, preferred_element_type=jnp.float32) + b2, 0.0)
    # Layer 3 (output_activation == 'none'): lane1 = q1, lane2 = q2, rest 0.
    q = jnp.dot(h, w3, preferred_element_type=jnp.float32) + b3  # (bb, 128)

    lane = jax.lax.broadcasted_iota(jnp.int32, q.shape, 1)
    masked = jnp.where((lane == 1) | (lane == 2), q, jnp.inf)
    qmin = jnp.min(masked, axis=-1, keepdims=True)   # (bb, 1) = min(q1, q2)
    out_ref[...] = jnp.where(lane == 0, qmin, q)     # lane0=qmin, 1=q1, 2=q2


def cont_twin_q_net(states, actions, params1, params2, *, block_rows=512):
    """Twin-Q forward: returns (min(q1, q2), q1, q2), each (batch, 1) float32."""
    B, S = states.shape
    _, A = actions.shape
    H = params1[0].shape[1]
    offs, rows = _slab_layout(S, A, H)
    slab = _pack_params(params1, params2, S, A)

    # Batch tiling: a single block for small B, otherwise a "parallel" 1-D grid
    # (rows per block capped so double-buffered tiles fit v7x's smaller VMEM).
    if B <= block_rows:
        bb = _ceil_to(B, 8)
        b_pad = bb
    else:
        bb = block_rows
        b_pad = _ceil_to(B, bb)
    if b_pad != B:
        states = jnp.pad(states, ((0, b_pad - B), (0, 0)))
        actions = jnp.pad(actions, ((0, b_pad - B), (0, 0)))

    kernel = functools.partial(
        _twin_q_kernel, state_dim=S, action_dim=A, offs=offs)

    flops = 2 * b_pad * ((S + A) * LANES + 2 * LANES * LANES)
    bytes_accessed = 4 * (b_pad * (S + A + LANES) + rows * LANES)

    out = pl.pallas_call(
        kernel,
        out_shape=jax.ShapeDtypeStruct((b_pad, LANES), jnp.float32),
        grid_spec=pltpu.PrefetchScalarGridSpec(
            num_scalar_prefetch=0,
            grid=(b_pad // bb,),
            in_specs=[
                pl.BlockSpec((bb, S), lambda i: (i, 0)),        # states tile
                pl.BlockSpec((bb, A), lambda i: (i, 0)),        # actions tile
                pl.BlockSpec((rows, LANES), lambda i: (0, 0)),  # param slab (DMA'd once)
            ],
            out_specs=pl.BlockSpec((bb, LANES), lambda i: (i, 0)),
        ),
        compiler_params=pltpu.CompilerParams(
            dimension_semantics=("parallel",)),
        cost_estimate=pl.CostEstimate(
            flops=flops, transcendentals=0, bytes_accessed=bytes_accessed),
    )(states, actions, slab)

    q_min = out[:B, 0:1]
    q1 = out[:B, 1:2]
    q2 = out[:B, 2:3]
    return q_min, q1, q2


# ---------------------------------------------------------------------------
# init helpers, pure-JAX reference, and demo
# ---------------------------------------------------------------------------
def _init_linear(key, in_features, out_features):
    """Deterministic init mimicking PyTorch nn.Linear default (+/- 1/sqrt(in))."""
    kw, kb = jax.random.split(key)
    bound = 1.0 / (in_features ** 0.5)
    w = jax.random.uniform(kw, (in_features, out_features), jnp.float32, -bound, bound)
    b = jax.random.uniform(kb, (out_features,), jnp.float32, -bound, bound)
    return w, b


def _init_qnet(key, in_dim, hidden, out_dim):
    k1, k2, k3 = jax.random.split(key, 3)
    w1, b1 = _init_linear(k1, in_dim, hidden)
    w2, b2 = _init_linear(k2, hidden, hidden)
    w3, b3 = _init_linear(k3, hidden, out_dim)
    return (w1, b1, w2, b2, w3, b3)


def _reference(states, actions, params1, params2):
    x = jnp.concatenate([states, actions], axis=1)

    def mlp(p):
        w1, b1, w2, b2, w3, b3 = p
        h = jnp.maximum(x @ w1 + b1, 0.0)
        h = jnp.maximum(h @ w2 + b2, 0.0)
        return h @ w3 + b3

    q1, q2 = mlp(params1), mlp(params2)
    return jnp.minimum(q1, q2), q1, q2


if __name__ == "__main__":
    key = jax.random.PRNGKey(0)
    k_s, k_a, k_n1, k_n2 = jax.random.split(key, 4)

    batch, state_dim, action_dim, hidden = 8, 12, 4, 32
    in_dim = state_dim + action_dim

    states = jax.random.normal(k_s, (batch, state_dim), jnp.float32)
    actions = jax.random.normal(k_a, (batch, action_dim), jnp.float32)

    params1 = _init_qnet(k_n1, in_dim, hidden, 1)
    params2 = _init_qnet(k_n2, in_dim, hidden, 1)

    q_min, q1, q2 = cont_twin_q_net(states, actions, params1, params2)
    jax.block_until_ready((q_min, q1, q2))

    # correctness check against pure-JAX reference
    r_min, r1, r2 = _reference(states, actions, params1, params2)
    assert jnp.allclose(q_min, r_min, atol=1e-4), "qmin mismatch"
    assert jnp.allclose(q1, r1, atol=1e-4), "q1 mismatch"
    assert jnp.allclose(q2, r2, atol=1e-4), "q2 mismatch"

    print("KERNEL_OK")
</pallas_src>

<mosaic_0001>
module attributes {stable_mosaic.version = 11 : i64} {
  func.func @_twin_q_kernel(%arg0: i32, %arg1: memref<8x12xf32, #tpu.memory_space<vmem>>, %arg2: memref<8x4xf32, #tpu.memory_space<vmem>>, %arg3: memref<304x128xf32, #tpu.memory_space<vmem>>, %arg4: memref<8x128xf32, #tpu.memory_space<vmem>>) attributes {dimension_semantics = [#tpu.dimension_semantics<parallel>], iteration_bounds = array<i64: 1>, scalar_prefetch = 0 : i64, scratch_operands = 0 : i64, tpu.core_type = #tpu.core_type<tc>, window_params = [{transform_indices = @transform_0, window_bounds = array<i64: 8, 12>}, {transform_indices = @transform_1, window_bounds = array<i64: 8, 4>}, {pipeline_mode = #tpu.pipeline_mode<synchronous>, transform_indices = @transform_2, window_bounds = array<i64: 304, 128>}, {transform_indices = @transform_3, window_bounds = array<i64: 8, 128>}]} {
    %c0 = arith.constant 0 : index
    %c0_0 = arith.constant 0 : index
    %0 = vector.load %arg1[%c0, %c0_0] : memref<8x12xf32, #tpu.memory_space<vmem>>, vector<8x12xf32>
    %c0_1 = arith.constant 0 : index
    %c0_2 = arith.constant 0 : index
    %1 = vector.load %arg2[%c0_1, %c0_2] : memref<8x4xf32, #tpu.memory_space<vmem>>, vector<8x4xf32>
    %c0_3 = arith.constant 0 : index
    %c0_4 = arith.constant 0 : index
    %2 = vector.load %arg3[%c0_3, %c0_4] : memref<304x128xf32, #tpu.memory_space<vmem>>, vector<12x128xf32>
    %c16 = arith.constant 16 : index
    %c0_5 = arith.constant 0 : index
    %3 = vector.load %arg3[%c16, %c0_5] : memref<304x128xf32, #tpu.memory_space<vmem>>, vector<4x128xf32>
    %c24 = arith.constant 24 : index
    %c0_6 = arith.constant 0 : index
    %4 = vector.load %arg3[%c24, %c0_6] : memref<304x128xf32, #tpu.memory_space<vmem>>, vector<1x128xf32>
    %c32 = arith.constant 32 : index
    %c0_7 = arith.constant 0 : index
    %5 = vector.load %arg3[%c32, %c0_7] : memref<304x128xf32, #tpu.memory_space<vmem>>, vector<128x128xf32>
    %c160 = arith.constant 160 : index
    %c0_8 = arith.constant 0 : index
    %6 = vector.load %arg3[%c160, %c0_8] : memref<304x128xf32, #tpu.memory_space<vmem>>, vector<1x128xf32>
    %c168 = arith.constant 168 : index
    %c0_9 = arith.constant 0 : index
    %7 = vector.load %arg3[%c168, %c0_9] : memref<304x128xf32, #tpu.memory_space<vmem>>, vector<128x128xf32>
    %c296 = arith.constant 296 : index
    %c0_10 = arith.constant 0 : index
    %8 = vector.load %arg3[%c296, %c0_10] : memref<304x128xf32, #tpu.memory_space<vmem>>, vector<1x128xf32>
    %cst = arith.constant dense<0.000000e+00> : vector<8x128xf32>
    %9 = tpu.matmul %0, %2, %cst {dimension_numbers = #tpu.dot_dimension_numbers<[1], [0], [0], [1], [0, 0, 1, 1], [], []>} : vector<8x12xf32>, vector<12x128xf32>, vector<8x128xf32> -> vector<8x128xf32>
    %cst_11 = arith.constant dense<0.000000e+00> : vector<8x128xf32>
    %10 = tpu.matmul %1, %3, %cst_11 {dimension_numbers = #tpu.dot_dimension_numbers<[1], [0], [0], [1], [0, 0, 1, 1], [], []>} : vector<8x4xf32>, vector<4x128xf32>, vector<8x128xf32> -> vector<8x128xf32>
    %11 = arith.addf %9, %10 : vector<8x128xf32>
    %12 = vector.broadcast %4 : vector<1x128xf32> to vector<8x128xf32>
    %13 = arith.addf %11, %12 : vector<8x128xf32>
    %cst_12 = arith.constant 0.000000e+00 : f32
    %14 = vector.broadcast %cst_12 : f32 to vector<8x128xf32>
    %15 = arith.maximumf %13, %14 : vector<8x128xf32>
    %cst_13 = arith.constant dense<0.000000e+00> : vector<8x128xf32>
    %16 = tpu.matmul %15, %5, %cst_13 {dimension_numbers = #tpu.dot_dimension_numbers<[1], [0], [0], [1], [0, 0, 1, 1], [], []>} : vector<8x128xf32>, vector<128x128xf32>, vector<8x128xf32> -> vector<8x128xf32>
    %17 = vector.broadcast %6 : vector<1x128xf32> to vector<8x128xf32>
    %18 = arith.addf %16, %17 : vector<8x128xf32>
    %cst_14 = arith.constant 0.000000e+00 : f32
    %19 = vector.broadcast %cst_14 : f32 to vector<8x128xf32>
    %20 = arith.maximumf %18, %19 : vector<8x128xf32>
    %cst_15 = arith.constant dense<0.000000e+00> : vector<8x128xf32>
    %21 = tpu.matmul %20, %7, %cst_15 {dimension_numbers = #tpu.dot_dimension_numbers<[1], [0], [0], [1], [0, 0, 1, 1], [], []>} : vector<8x128xf32>, vector<128x128xf32>, vector<8x128xf32> -> vector<8x128xf32>
    %22 = vector.broadcast %8 : vector<1x128xf32> to vector<8x128xf32>
    %23 = arith.addf %21, %22 : vector<8x128xf32>
    %24 = tpu.iota {dimensions = array<i32: 1>} : vector<8x128xi32>
    %c1_i32 = arith.constant 1 : i32
    %25 = vector.broadcast %c1_i32 : i32 to vector<8x128xi32>
    %26 = arith.cmpi eq, %24, %25 : vector<8x128xi32>
    %c2_i32 = arith.constant 2 : i32
    %27 = vector.broadcast %c2_i32 : i32 to vector<8x128xi32>
    %28 = arith.cmpi eq, %24, %27 : vector<8x128xi32>
    %29 = arith.ori %26, %28 : vector<8x128xi1>
    %cst_16 = arith.constant 0x7F800000 : f32
    %30 = vector.broadcast %cst_16 : f32 to vector<8x128xf32>
    %31 = arith.select %29, %23, %30 : vector<8x128xi1>, vector<8x128xf32>
    %cst_17 = arith.constant dense<0x7F800000> : vector<8xf32>
    %32 = vector.multi_reduction <minimumf>, %31, %cst_17 [1] : vector<8x128xf32> to vector<8xf32>
    %33 = vector.shape_cast %32 : vector<8xf32> to vector<8x1xf32>
    %c0_i32 = arith.constant 0 : i32
    %34 = vector.broadcast %c0_i32 : i32 to vector<8x128xi32>
    %35 = arith.cmpi eq, %24, %34 : vector<8x128xi32>
    %36 = vector.shape_cast %33 : vector<8x1xf32> to vector<8x1xf32>
    %37 = vector.broadcast %36 : vector<8x1xf32> to vector<8x128xf32>
    %38 = arith.select %35, %37, %23 : vector<8x128xi1>, vector<8x128xf32>
    %c0_18 = arith.constant 0 : index
    %c0_19 = arith.constant 0 : index
    %39 = vector.load %arg4[%c0_18, %c0_19] : memref<8x128xf32, #tpu.memory_space<vmem>>, vector<8x128xf32>
    tpu.vector_store %arg4[%c0_18, %c0_19], %38 {strides = array<i32>} : memref<8x128xf32, #tpu.memory_space<vmem>>, vector<8x128xf32>,
    return
  }
  func.func @transform_0(%arg0: i32) -> (i32, i32) {
    %c0_i32 = arith.constant 0 : i32
    %c0_i32_0 = arith.constant 0 : i32
    return %arg0, %c0_i32 : i32, i32
  }
  func.func @transform_1(%arg0: i32) -> (i32, i32) {
    %c0_i32 = arith.constant 0 : i32
    %c0_i32_0 = arith.constant 0 : i32
    return %arg0, %c0_i32 : i32, i32
  }
  func.func @transform_2(%arg0: i32) -> (i32, i32) {
    %c0_i32 = arith.constant 0 : i32
    %c0_i32_0 = arith.constant 0 : i32
    %c0_i32_1 = arith.constant 0 : i32
    return %c0_i32, %c0_i32_0 : i32, i32
  }
  func.func @transform_3(%arg0: i32) -> (i32, i32) {
    %c0_i32 = arith.constant 0 : i32
    %c0_i32_0 = arith.constant 0 : i32
    return %arg0, %c0_i32 : i32, i32
  }
}

</mosaic_0001>

<llo_original>
// kernel: tpu_custom_call.1
$region0: #{tpu_custom_call.1}
  #allocation0 [shape = 'u32[]', space=smem, size = 0x4, offset = 0x4, fixed_abs, tag = 'smem constant byte address 0x4 - core index']
  #allocation1 [shape = 'u32[144,128]{1,0:T(1,128)}', space=vmem, size = 0x12000, scoped, tag = 'internal scratch']
  %s0 = inlined_call_operand.vmem [shape: f32[8,12], index: 0, kind: input, shape index: {}]
  %s1 = inlined_call_operand.vmem [shape: f32[8,4], index: 1, kind: input, shape index: {}]
  %s2 = inlined_call_operand.hbm [shape: f32[304,128], index: 2, kind: input, shape index: {}]
  %s3 = inlined_call_operand.hbm [shape: f32[8,128], index: 3, kind: output, shape index: {}]
  %s4 = sld [smem:[#allocation0]]
  $region26: #{tpu_custom_call.1} parent=0
    _
  %s6 = ssub.s32 1, %s4
  %s7 = scalar_select 0, %s6, %s4
  $region1: #{tpu_custom_call.1} parent=0
    #allocation2 [shape = 'u8[155648]{0}', space=vmem, size = 0x26000, scoped, tag = 'input window, operand 2, single buffered']
    #allocation3 [shape = 's32[1]{0}', space=sflag, size = 0x4, scoped, tag = 'scoped memory for tpu_custom_call.1']
    #allocation4 [shape = 's32[1]{0}', space=sflag, size = 0x4, scoped, tag = 'scoped memory for tpu_custom_call.1']
    #allocation5 [shape = 'u8[4096]{0}', space=vmem, size = 0x1000, scoped, tag = 'output window, operand 0, single buffered']
    %8 = vsyncpa [#allocation3], 0
    %9 = vsyncpa [#allocation4], 0
    // Predicated region
    $region2: #{tpu_custom_call.1} parent=1 // pred_check
      _
    $region3: #{tpu_custom_call.1} parent=1 // pred_check_branch
      %11 = sbr.rel (0) target = $region5
    $region4: #{tpu_custom_call.1} parent=1 // pred_region
      _
    $region5: #{tpu_custom_call.1} parent=1 // pred_fallthru
      _
    // Predicated region
    $region6: #{tpu_custom_call.1} parent=1 // pred_check
      _
    $region7: #{tpu_custom_call.1} parent=1 // pred_check_branch
      %13 = sbr.rel (0) target = $region9
    $region8: #{tpu_custom_call.1} parent=1 // pred_region
      _
    $region9: #{tpu_custom_call.1} parent=1 // pred_fallthru
      _
    // Predicated region
    $region10: #{tpu_custom_call.1} parent=1 // pred_check
      _
    $region11: #{tpu_custom_call.1} parent=1 // pred_check_branch
      %15 = sbr.rel (0) target = $region13
    $region12: #{tpu_custom_call.1} parent=1 // pred_region
      %s17 = ssub.s32 4864, 4864
      %18 = vsyncadd [#allocation3], %s17
      %s19 = sshll.u32 [#allocation2], 4
      %s20 = int_to_ptr.vmem [resolvable:$true] %s19
      %25 = dma.hbm_to_vmem [thread:$0]  %s2, 4864, %s20, [#allocation3], 128, 128, 8
    $region13: #{tpu_custom_call.1} parent=1 // pred_fallthru
      _
    // Predicated region
    $region14: #{tpu_custom_call.1} parent=1 // pred_check
      _
    $region15: #{tpu_custom_call.1} parent=1 // pred_check_branch
      %27 = sbr.rel (0) target = $region17
    $region16: #{tpu_custom_call.1} parent=1 // pred_region
      %28 = dma.done [#allocation3], 4864
    $region17: #{tpu_custom_call.1} parent=1 // pred_fallthru
      _
    %v29 = vld [vmem:[%s0] sm:$0xff]
    %v30 = vld [vmem:[%s1] sm:$0xff]
    %v31 = vld [vmem:[#allocation2] sm:$0xff]
    %v32 = vld [vmem:[#allocation2 + $0x8] sm:$0xf]
    %v33 = vld [vmem:[#allocation2 + $0x10] sm:$0xf]
    %v34 = vld [vmem:[#allocation2 + $0x18] sm:$0x1]
    %v35 = vld [vmem:[#allocation2 + $0x20] sm:$0xff]
    %v36 = vld [vmem:[#allocation2 + $0x28] sm:$0xff]
    %v37 = vld [vmem:[#allocation2 + $0x30] sm:$0xff]
    %v38 = vld [vmem:[#allocation2 + $0x38] sm:$0xff]
    %v39 = vld [vmem:[#allocation2 + $0x40] sm:$0xff]
    %v40 = vld [vmem:[#allocation2 + $0x48] sm:$0xff]
    %v41 = vld [vmem:[#allocation2 + $0x50] sm:$0xff]
    %v42 = vld [vmem:[#allocation2 + $0x58] sm:$0xff]
    %v43 = vld [vmem:[#allocation2 + $0x60] sm:$0xff]
    %v44 = vld [vmem:[#allocation2 + $0x68] sm:$0xff]
    %v45 = vld [vmem:[#allocation2 + $0x70] sm:$0xff]
    %v46 = vld [vmem:[#allocation2 + $0x78] sm:$0xff]
    %v47 = vld [vmem:[#allocation2 + $0x80] sm:$0xff]
    %v48 = vld [vmem:[#allocation2 + $0x88] sm:$0xff]
    %v49 = vld [vmem:[#allocation2 + $0x90] sm:$0xff]
    %v50 = vld [vmem:[#allocation2 + $0x98] sm:$0xff]
    %v51 = vld [vmem:[#allocation2 + $0xa0] sm:$0x1]
    %v52 = vld [vmem:[#allocation2 + $0xa8] sm:$0xff]
    %v53 = vld [vmem:[#allocation2 + $0xb0] sm:$0xff]
    %v54 = vld [vmem:[#allocation2 + $0xb8] sm:$0xff]
    %v55 = vld [vmem:[#allocation2 + $0xc0] sm:$0xff]
    %v56 = vld [vmem:[#allocation2 + $0xc8] sm:$0xff]
    %v57 = vld [vmem:[#allocation2 + $0xd0] sm:$0xff]
    %v58 = vld [vmem:[#allocation2 + $0xd8] sm:$0xff]
    %v59 = vld [vmem:[#allocation2 + $0xe0] sm:$0xff]
    %v60 = vld [vmem:[#allocation2 + $0xe8] sm:$0xff]
    %v61 = vld [vmem:[#allocation2 + $0xf0] sm:$0xff]
    %v62 = vld [vmem:[#allocation2 + $0xf8] sm:$0xff]
    %v63 = vld [vmem:[#allocation2 + $0x100] sm:$0xff]
    %v64 = vld [vmem:[#allocation2 + $0x108] sm:$0xff]
    %v65 = vld [vmem:[#allocation2 + $0x110] sm:$0xff]
    %v66 = vld [vmem:[#allocation2 + $0x118] sm:$0xff]
    %v67 = vld [vmem:[#allocation2 + $0x120] sm:$0xff]
    %v68 = vld [vmem:[#allocation2 + $0x128] sm:$0x1]
    %vm69 = vcmask 31744
    %v71 = vsel %vm69, %v30, 0
    %vm73 = vcmask 1043456
    %v75 = vsel %vm73, %v33, 0
    %77 = vmatprep.subr.mxu0 0.0
    %78 = vmatpush1.msra.mxu0 %v75
    %79 = vmatprep.subr.mxu0 0.0
    %80 = vmatpush1.msra.mxu0 0.0
    %81 = vmatprep.subr.mxu0 0.0
    %82 = vmatpush1.msra.mxu0 0.0
    %83 = vmatprep.subr.mxu0 0.0
    %84 = vmatpush1.msra.mxu0 0.0
    %85 = vmatprep.subr.mxu0 0.0
    %86 = vmatpush1.msra.mxu0 0.0
    %87 = vmatprep.subr.mxu0 0.0
    %88 = vmatpush1.msra.mxu0 0.0
    %89 = vmatprep.subr.mxu0 0.0
    %90 = vmatpush1.msra.mxu0 0.0
    %91 = vmatprep.subr.mxu0 0.0
    %92 = vmatpush1.msra.mxu0 0.0
    %93 = vmatprep.subr.mxu0 0.0
    %94 = vmatpush1.msra.mxu0 0.0
    %95 = vmatprep.subr.mxu0 0.0
    %96 = vmatpush1.msra.mxu0 0.0
    %97 = vmatprep.subr.mxu0 0.0
    %98 = vmatpush1.msra.mxu0 0.0
    %99 = vmatprep.subr.mxu0 0.0
    %100 = vmatpush1.msra.mxu0 0.0
    %101 = vmatprep.subr.mxu0 0.0
    %102 = vmatpush1.msra.mxu0 0.0
    %103 = vmatprep.subr.mxu0 0.0
    %104 = vmatpush1.msra.mxu0 0.0
    %105 = vmatprep.subr.mxu0 0.0
    %106 = vmatpush1.msra.mxu0 0.0
    %107 = vmatprep.subr.mxu0 0.0
    %108 = vmatpush1.msra.mxu0 0.0
    %109 = vmatprep.subr.mxu0 0.0
    %110 = vmatpush1.msra.mxu0 0.0
    %111 = vmatprep.subr.mxu0 0.0
    %112 = vmatpush1.msra.mxu0 0.0
    %113 = vmatprep.subr.mxu0 0.0
    %114 = vmatpush1.msra.mxu0 0.0
    %115 = vmatprep.subr.mxu0 0.0
    %116 = vmatpush1.msra.mxu0 0.0
    %117 = vmatprep.subr.mxu0 0.0
    %118 = vmatpush1.msra.mxu0 0.0
    %119 = vmatprep.subr.mxu0 0.0
    %120 = vmatpush1.msra.mxu0 0.0
    %121 = vmatprep.subr.mxu0 0.0
    %122 = vmatpush1.msra.mxu0 0.0
    %123 = vmatprep.subr.mxu0 0.0
    %124 = vmatpush1.msra.mxu0 0.0
    %125 = vmatprep.subr.mxu0 0.0
    %126 = vmatpush1.msra.mxu0 0.0
    %127 = vmatprep.subr.mxu0 0.0
    %128 = vmatpush1.msra.mxu0 0.0
    %129 = vmatprep.subr.mxu0 0.0
    %130 = vmatpush1.msra.mxu0 0.0
    %131 = vmatprep.subr.mxu0 0.0
    %132 = vmatpush1.msra.mxu0 0.0
    %133 = vmatprep.subr.mxu0 0.0
    %134 = vmatpush1.msra.mxu0 0.0
    %135 = vmatprep.subr.mxu0 0.0
    %136 = vmatpush1.msra.mxu0 0.0
    %137 = vmatprep.subr.mxu0 0.0
    %138 = vmatpush1.msra.mxu0 0.0
    %139 = vmatprep.subr.mxu0 0.0
    %140 = vmatpush1.msra.mxu0 0.0
    %141 = vmatprep.mubr.f32.mxu0 0.0
    %142 = vmatmul.mubr.f32.gmra.mrb[0].mxu0 %v71
    %v143 = vpop.f32.mrb[0].mxu0
    %v144 = vadd.f32 0.0, %v143
    %v145 = vpop.f32.mrb[0].mxu0
    %146 = vdwg.mxu0
    %vm147 = vcmask 97280
    %v149 = vsel %vm147, %v29, 0
    %v152 = vsel %vm73, %v32, 0
    %154 = vmatprep.subr.mxu0 0.0
    %155 = vmatpush1.msra.mxu0 %v31
    %156 = vmatprep.subr.mxu0 0.0
    %157 = vmatpush1.msra.mxu0 %v152
    %158 = vmatprep.subr.mxu0 0.0
    %159 = vmatpush1.msra.mxu0 0.0
    %160 = vmatprep.subr.mxu0 0.0
    %161 = vmatpush1.msra.mxu0 0.0
    %162 = vmatprep.subr.mxu0 0.0
    %163 = vmatpush1.msra.mxu0 0.0
    %164 = vmatprep.subr.mxu0 0.0
    %165 = vmatpush1.msra.mxu0 0.0
    %166 = vmatprep.subr.mxu0 0.0
    %167 = vmatpush1.msra.mxu0 0.0
    %168 = vmatprep.subr.mxu0 0.0
    %169 = vmatpush1.msra.mxu0 0.0
    %170 = vmatprep.subr.mxu0 0.0
    %171 = vmatpush1.msra.mxu0 0.0
    %172 = vmatprep.subr.mxu0 0.0
    %173 = vmatpush1.msra.mxu0 0.0
    %174 = vmatprep.subr.mxu0 0.0
    %175 = vmatpush1.msra.mxu0 0.0
    %176 = vmatprep.subr.mxu0 0.0
    %177 = vmatpush1.msra.mxu0 0.0
    %178 = vmatprep.subr.mxu0 0.0
    %179 = vmatpush1.msra.mxu0 0.0
    %180 = vmatprep.subr.mxu0 0.0
    %181 = vmatpush1.msra.mxu0 0.0
    %182 = vmatprep.subr.mxu0 0.0
    %183 = vmatpush1.msra.mxu0 0.0
    %184 = vmatprep.subr.mxu0 0.0
    %185 = vmatpush1.msra.mxu0 0.0
    %186 = vmatprep.subr.mxu0 0.0
    %187 = vmatpush1.msra.mxu0 0.0
    %188 = vmatprep.subr.mxu0 0.0
    %189 = vmatpush1.msra.mxu0 0.0
    %190 = vmatprep.subr.mxu0 0.0
    %191 = vmatpush1.msra.mxu0 0.0
    %192 = vmatprep.subr.mxu0 0.0
    %193 = vmatpush1.msra.mxu0 0.0
    %194 = vmatprep.subr.mxu0 0.0
    %195 = vmatpush1.msra.mxu0 0.0
    %196 = vmatprep.subr.mxu0 0.0
    %197 = vmatpush1.msra.mxu0 0.0
    %198 = vmatprep.subr.mxu0 0.0
    %199 = vmatpush1.msra.mxu0 0.0
    %200 = vmatprep.subr.mxu0 0.0
    %201 = vmatpush1.msra.mxu0 0.0
    %202 = vmatprep.subr.mxu0 0.0
    %203 = vmatpush1.msra.mxu0 0.0
    %204 = vmatprep.subr.mxu0 0.0
    %205 = vmatpush1.msra.mxu0 0.0
    %206 = vmatprep.subr.mxu0 0.0
    %207 = vmatpush1.msra.mxu0 0.0
    %208 = vmatprep.subr.mxu0 0.0
    %209 = vmatpush1.msra.mxu0 0.0
    %210 = vmatprep.subr.mxu0 0.0
    %211 = vmatpush1.msra.mxu0 0.0
    %212 = vmatprep.subr.mxu0 0.0
    %213 = vmatpush1.msra.mxu0 0.0
    %214 = vmatprep.subr.mxu0 0.0
    %215 = vmatpush1.msra.mxu0 0.0
    %216 = vmatprep.subr.mxu0 0.0
    %217 = vmatpush1.msra.mxu0 0.0
    %218 = vmatprep.mubr.f32.mxu0 0.0
    %219 = vmatmul.mubr.f32.gmra.mrb[0].mxu0 %v149
    %v220 = vpop.f32.mrb[0].mxu0
    %v221 = vadd.f32 %v144, %v220
    %v222 = vpop.f32.mrb[0].mxu0
    %223 = vdwg.mxu0
    %v224 = vlaneseq
    %v225 = vshrl.u32 %v224, 7
    %v226 = vsub.s32 0, %v225
    %v227 = vrot.slane %v34, %v226
    %v228 = vadd.f32 %v221, %v227
    %v229 = vmax.f32 %v228, 0.0
    %v230 = vlaneseq
    %v231 = vshrl.u32 %v230, 7
    %v232 = vsub.s32 0, %v231
    %v233 = vrot.slane %v51, %v232
    %234 = vmatprep.subr.mxu0 0.0
    %235 = vmatpush1.msra.mxu0 %v35
    %236 = vmatprep.subr.mxu0 0.0
    %237 = vmatpush1.msra.mxu0 %v36
    %238 = vmatprep.subr.mxu0 0.0
    %239 = vmatpush1.msra.mxu0 %v37
    %240 = vmatprep.subr.mxu0 0.0
    %241 = vmatpush1.msra.mxu0 %v38
    %242 = vmatprep.subr.mxu0 0.0
    %243 = vmatpush1.msra.mxu0 %v39
    %244 = vmatprep.subr.mxu0 0.0
    %245 = vmatpush1.msra.mxu0 %v40
    %246 = vmatprep.subr.mxu0 0.0
    %247 = vmatpush1.msra.mxu0 %v41
    %248 = vmatprep.subr.mxu0 0.0
    %249 = vmatpush1.msra.mxu0 %v42
    %250 = vmatprep.subr.mxu0 0.0
    %251 = vmatpush1.msra.mxu0 %v43
    %252 = vmatprep.subr.mxu0 0.0
    %253 = vmatpush1.msra.mxu0 %v44
    %254 = vmatprep.subr.mxu0 0.0
    %255 = vmatpush1.msra.mxu0 %v45
    %256 = vmatprep.subr.mxu0 0.0
    %257 = vmatpush1.msra.mxu0 %v46
    %258 = vmatprep.subr.mxu0 0.0
    %259 = vmatpush1.msra.mxu0 %v47
    %260 = vmatprep.subr.mxu0 0.0
    %261 = vmatpush1.msra.mxu0 %v48
    %262 = vmatprep.subr.mxu0 0.0
    %263 = vmatpush1.msra.mxu0 %v49
    %264 = vmatprep.subr.mxu0 0.0
    %265 = vmatpush1.msra.mxu0 %v50
    %266 = vmatprep.subr.mxu0 0.0
    %267 = vmatpush1.msra.mxu0 0.0
    %268 = vmatprep.subr.mxu0 0.0
    %269 = vmatpush1.msra.mxu0 0.0
    %270 = vmatprep.subr.mxu0 0.0
    %271 = vmatpush1.msra.mxu0 0.0
    %272 = vmatprep.subr.mxu0 0.0
    %273 = vmatpush1.msra.mxu0 0.0
    %274 = vmatprep.subr.mxu0 0.0
    %275 = vmatpush1.msra.mxu0 0.0
    %276 = vmatprep.subr.mxu0 0.0
    %277 = vmatpush1.msra.mxu0 0.0
    %278 = vmatprep.subr.mxu0 0.0
    %279 = vmatpush1.msra.mxu0 0.0
    %280 = vmatprep.subr.mxu0 0.0
    %281 = vmatpush1.msra.mxu0 0.0
    %282 = vmatprep.subr.mxu0 0.0
    %283 = vmatpush1.msra.mxu0 0.0
    %284 = vmatprep.subr.mxu0 0.0
    %285 = vmatpush1.msra.mxu0 0.0
    %286 = vmatprep.subr.mxu0 0.0
    %287 = vmatpush1.msra.mxu0 0.0
    %288 = vmatprep.subr.mxu0 0.0
    %289 = vmatpush1.msra.mxu0 0.0
    %290 = vmatprep.subr.mxu0 0.0
    %291 = vmatpush1.msra.mxu0 0.0
    %292 = vmatprep.subr.mxu0 0.0
    %293 = vmatpush1.msra.mxu0 0.0
    %294 = vmatprep.subr.mxu0 0.0
    %295 = vmatpush1.msra.mxu0 0.0
    %296 = vmatprep.subr.mxu0 0.0
    %297 = vmatpush1.msra.mxu0 0.0
    %298 = vmatprep.mubr.f32.mxu0 0.0
    %299 = vmatmul.mubr.f32.gmra.mrb[0].mxu0 %v229
    %v300 = vpop.f32.mrb[0].mxu0
    %v301 = vadd.f32 %v233, %v300
    %v302 = vpop.f32.mrb[0].mxu0
    %303 = vdwg.mxu0
    %v304 = vmax.f32 %v301, 0.0
    %v305 = vlaneseq
    %v306 = vshrl.u32 %v305, 7
    %v307 = vsub.s32 0, %v306
    %v308 = vrot.slane %v68, %v307
    %309 = vmatprep.subr.mxu0 0.0
    %310 = vmatpush1.msra.mxu0 %v52
    %311 = vmatprep.subr.mxu0 0.0
    %312 = vmatpush1.msra.mxu0 %v53
    %313 = vmatprep.subr.mxu0 0.0
    %314 = vmatpush1.msra.mxu0 %v54
    %315 = vmatprep.subr.mxu0 0.0
    %316 = vmatpush1.msra.mxu0 %v55
    %317 = vmatprep.subr.mxu0 0.0
    %318 = vmatpush1.msra.mxu0 %v56
    %319 = vmatprep.subr.mxu0 0.0
    %320 = vmatpush1.msra.mxu0 %v57
    %321 = vmatprep.subr.mxu0 0.0
    %322 = vmatpush1.msra.mxu0 %v58
    %323 = vmatprep.subr.mxu0 0.0
    %324 = vmatpush1.msra.mxu0 %v59
    %325 = vmatprep.subr.mxu0 0.0
    %326 = vmatpush1.msra.mxu0 %v60
    %327 = vmatprep.subr.mxu0 0.0
    %328 = vmatpush1.msra.mxu0 %v61
    %329 = vmatprep.subr.mxu0 0.0
    %330 = vmatpush1.msra.mxu0 %v62
    %331 = vmatprep.subr.mxu0 0.0
    %332 = vmatpush1.msra.mxu0 %v63
    %333 = vmatprep.subr.mxu0 0.0
    %334 = vmatpush1.msra.mxu0 %v64
    %335 = vmatprep.subr.mxu0 0.0
    %336 = vmatpush1.msra.mxu0 %v65
    %337 = vmatprep.subr.mxu0 0.0
    %338 = vmatpush1.msra.mxu0 %v66
    %339 = vmatprep.subr.mxu0 0.0
    %340 = vmatpush1.msra.mxu0 %v67
    %341 = vmatprep.subr.mxu0 0.0
    %342 = vmatpush1.msra.mxu0 0.0
    %343 = vmatprep.subr.mxu0 0.0
    %344 = vmatpush1.msra.mxu0 0.0
    %345 = vmatprep.subr.mxu0 0.0
    %346 = vmatpush1.msra.mxu0 0.0
    %347 = vmatprep.subr.mxu0 0.0
    %348 = vmatpush1.msra.mxu0 0.0
    %349 = vmatprep.subr.mxu0 0.0
    %350 = vmatpush1.msra.mxu0 0.0
    %351 = vmatprep.subr.mxu0 0.0
    %352 = vmatpush1.msra.mxu0 0.0
    %353 = vmatprep.subr.mxu0 0.0
    %354 = vmatpush1.msra.mxu0 0.0
    %355 = vmatprep.subr.mxu0 0.0
    %356 = vmatpush1.msra.mxu0 0.0
    %357 = vmatprep.subr.mxu0 0.0
    %358 = vmatpush1.msra.mxu0 0.0
    %359 = vmatprep.subr.mxu0 0.0
    %360 = vmatpush1.msra.mxu0 0.0
    %361 = vmatprep.subr.mxu0 0.0
    %362 = vmatpush1.msra.mxu0 0.0
    %363 = vmatprep.subr.mxu0 0.0
    %364 = vmatpush1.msra.mxu0 0.0
    %365 = vmatprep.subr.mxu0 0.0
    %366 = vmatpush1.msra.mxu0 0.0
    %367 = vmatprep.subr.mxu0 0.0
    %368 = vmatpush1.msra.mxu0 0.0
    %369 = vmatprep.subr.mxu0 0.0
    %370 = vmatpush1.msra.mxu0 0.0
    %371 = vmatprep.subr.mxu0 0.0
    %372 = vmatpush1.msra.mxu0 0.0
    %373 = vmatprep.mubr.f32.mxu0 0.0
    %374 = vmatmul.mubr.f32.gmra.mrb[0].mxu0 %v304
    %v375 = vpop.f32.mrb[0].mxu0
    %v376 = vadd.f32 %v308, %v375
    %v377 = vpop.f32.mrb[0].mxu0
    %378 = vdwg.mxu0
    %v379 = vlaneseq
    %v380 = vand.u32 %v379, 127
    %vm381 = vcmp.eq.s32.totalorder %v380, 1
    %vm382 = vcmp.eq.s32.totalorder %v380, 2
    %vm383 = vmor %vm381, %vm382
    %v384 = vsel %vm383, %v376, inf
    %385 = vmin.xlane.f32.xlu0 %v384
    %v386 = vpop.xlane.xlu0 %385
    %vm387 = vcmp.eq.s32.totalorder %v380, 0
    %v388 = vsel %vm387, %v386, %v376
    %389 = vst [vmem:[#allocation5] sm:$0xff] %v388
    // Predicated region
    $region18: #{tpu_custom_call.1} parent=1 // pred_check
      _
    $region19: #{tpu_custom_call.1} parent=1 // pred_check_branch
      %391 = sbr.rel (0) target = $region21
    $region20: #{tpu_custom_call.1} parent=1 // pred_region
      %s393 = ssub.s32 128, 128
      %394 = vsyncadd [#allocation4], %s393
      %s396 = sshll.u32 [#allocation5], 4
      %s397 = int_to_ptr.vmem [resolvable:$true] %s396
      %399 = dma.vmem_to_hbm [thread:$0]  %s397, 128, %s3, [#allocation4]
    $region21: #{tpu_custom_call.1} parent=1 // pred_fallthru
      _
    // Predicated region
    $region22: #{tpu_custom_call.1} parent=1 // pred_check
      _
    $region23: #{tpu_custom_call.1} parent=1 // pred_check_branch
      %401 = sbr.rel (0) target = $region25
    $region24: #{tpu_custom_call.1} parent=1 // pred_region
      %402 = dma.done [#allocation4], 128
    $region25: #{tpu_custom_call.1} parent=1 // pred_fallthru
      _
    %403 = vsyncpa [#allocation3], 1
    %404 = vsyncpa [#allocation4], 1

</llo_original>
